<compile_context>
chip_gen: v7x
topology: tpu7x:2x2x1
jax: 0.10.0
libtpu: 0.0.40
codegen_flags: <defaults>
</compile_context>

<pallas_src>
import math
from functools import lru_cache

import jax
import jax.numpy as jnp
from jax.experimental import pallas as pl
from jax.experimental.pallas import tpu as pltpu


LANES = 128
ROW_ALIGN = 32                       # covers f32 (8), bf16 (16), int8/fp8 (32) sublane packing
SMALL_BYPASS_BYTES = 2 * 1024 * 1024 # below this the fixed launch cost dominates the copy


def _ceil_div(a: int, b: int) -> int:
    return -(-a // b)


# --------------------------------------------------------------------------- kernels
def _copy_kernel(x_ref, o_ref):
    # Identity data movement -- the only "compute" a row-major view implies.
    o_ref[...] = x_ref[...]


def _dma_copy_kernel(x_hbm, o_hbm, sem):
    # Direct HBM->HBM copy via the DMA engine: no VMEM bounce, no tiling rules.
    cp = pltpu.make_async_copy(x_hbm, o_hbm, sem)
    cp.start()
    cp.wait()


# --------------------------------------------------------------------------- sizing
@lru_cache(maxsize=None)
def _hw_params():
    """Returns (target_block_bytes, vmem_limit_bytes) gated on the TPU generation."""
    vmem_bytes = 128 * 1024 * 1024
    kind = ""
    try:
        vmem_bytes = int(pltpu.get_tpu_info().vmem_capacity_bytes)
    except Exception:
        pass
    try:
        kind = jax.devices()[0].device_kind.lower()
    except Exception:
        pass
    if vmem_bytes <= 80 * 1024 * 1024:
        # v7x-class (64 MiB per TC, 3.2 TB/s HBM): 8 MiB blocks keep the ~0.35 us
        # per-step overhead <10% of DMA time; 2x(in+out) = 32 MiB fits the 48 MiB cap.
        return 8 * 1024 * 1024, 48 * 1024 * 1024
    if "v5" in kind:
        # v5e (~820 GB/s): a 4 MiB step is ~10 us round trip, step overhead <4%;
        # bigger tiles buy nothing.  Explicit limit still needed (scoped default 16 MiB).
        return 4 * 1024 * 1024, 48 * 1024 * 1024
    # v6e / other 128 MiB-VMEM parts: free headroom for larger blocks.
    return 8 * 1024 * 1024, 80 * 1024 * 1024


def _choose_layout(total: int, itemsize: int, target_block_bytes: int):
    """Pick a lane-dense [rows, width] factorization and a balanced multi-MiB row tile."""
    assert total % LANES == 0
    cols = total // LANES
    g = math.gcd(cols, 256)                       # widest power-of-two lane group (width <= 32768)
    while g > 1 and total // (LANES * g) < 2 * ROW_ALIGN:
        g //= 2                                   # keep enough rows to split into >=2 blocks
    width = LANES * g
    rows = total // width

    if rows <= ROW_ALIGN:
        return rows, width, rows                  # single full-extent block (exempt from (8,128))

    row_bytes = width * itemsize
    target_rows = max(ROW_ALIGN, target_block_bytes // row_bytes)
    nblocks = _ceil_div(rows, target_rows)
    nblocks = max(nblocks, 2)                     # >=2 steps so both v7x TensorCores stream
    if nblocks % 2:                               # even step count -> balanced 2-TC split
        nblocks += 1
    tile_rows = _ceil_div(rows, nblocks)          # balanced: last block never near-empty
    tile_rows = _ceil_div(tile_rows, ROW_ALIGN) * ROW_ALIGN
    tile_rows = max(1, min(tile_rows, rows))
    return rows, width, tile_rows


# --------------------------------------------------------------------------- pallas wrappers
def _pallas_copy_2d(x2d: jax.Array, tile_rows: int, vmem_limit_bytes: int) -> jax.Array:
    """Tiled streaming copy of a [rows, width] lane-dense slab (128-aligned path)."""
    rows, width = x2d.shape
    nbytes = x2d.size * x2d.dtype.itemsize
    grid = (_ceil_div(rows, tile_rows),)          # partial last block is masked by Pallas
    return pl.pallas_call(
        _copy_kernel,
        out_shape=jax.ShapeDtypeStruct((rows, width), x2d.dtype),
        grid_spec=pltpu.PrefetchScalarGridSpec(
            num_scalar_prefetch=0,
            grid=grid,
            in_specs=[pl.BlockSpec((tile_rows, width), lambda i: (i, 0))],
            out_specs=pl.BlockSpec((tile_rows, width), lambda i: (i, 0)),
        ),
        compiler_params=pltpu.CompilerParams(
            dimension_semantics=("parallel",),    # lets v7x shard the grid over its 2 TCs
            vmem_limit_bytes=vmem_limit_bytes,
        ),
        cost_estimate=pl.CostEstimate(
            flops=0, transcendentals=0, bytes_accessed=2 * nbytes),
    )(x2d)


def _pallas_copy_dma(flat: jax.Array) -> jax.Array:
    """Single HBM->HBM DMA copy of a flat buffer (any length, no padding/slicing)."""
    # TODO(synk): for very large misaligned totals, chunk this into a few in-flight
    # DMAs for slightly better HBM overlap; a single descriptor is already 1R+1W.
    n = flat.shape[0]
    nbytes = n * flat.dtype.itemsize
    return pl.pallas_call(
        _dma_copy_kernel,
        out_shape=jax.ShapeDtypeStruct((n,), flat.dtype),
        in_specs=[pl.BlockSpec(memory_space=pl.ANY)],
        out_specs=pl.BlockSpec(memory_space=pl.ANY),
        scratch_shapes=[pltpu.SemaphoreType.DMA],
        cost_estimate=pl.CostEstimate(
            flops=0, transcendentals=0, bytes_accessed=2 * nbytes),
    )(flat)


# --------------------------------------------------------------------------- public API
def reshape_pallas(x: jax.Array, shape, *, copy: str = "auto") -> jax.Array:
    """Equivalent of torch.Tensor.view(shape) (supports a single -1).

    copy="never"  : pure view semantics, metadata-only (matches torch .view exactly).
    copy="auto"   : metadata-only for small tensors; Pallas streaming copy for large ones.
    copy="always" : always run the Pallas copy kernel (fresh contiguous buffer).
    """
    total = math.prod(x.shape)

    shape = tuple(int(s) for s in shape)
    if -1 in shape:
        if shape.count(-1) != 1:
            raise ValueError("only one -1 allowed in view shape")
        known = math.prod(s for s in shape if s != -1)
        if known == 0 or total % known != 0:
            raise ValueError(f"cannot view tensor of {total} elements as {shape}")
        shape = tuple(total // known if s == -1 else s for s in shape)
    if math.prod(shape) != total:
        raise ValueError("view size incompatible with input")

    nbytes = total * x.dtype.itemsize
    if (
        total == 0
        or copy == "never"
        or (copy == "auto" and nbytes < SMALL_BYPASS_BYTES)
    ):
        # Metadata-only: zero HBM traffic, identical semantics to torch .view on a
        # contiguous tensor.  This is also the right path for donated buffers.
        return x.reshape(shape)

    flat = x.reshape(-1)                          # metadata-only on a contiguous array

    if total % LANES == 0:
        # Fast path: lane-dense 2-D slab, exactly one read + one write of the data.
        target_block_bytes, vmem_limit_bytes = _hw_params()
        rows, width, tile_rows = _choose_layout(total, x.dtype.itemsize, target_block_bytes)
        out2d = _pallas_copy_2d(flat.reshape(rows, width), tile_rows, vmem_limit_bytes)
        return out2d.reshape(shape)               # metadata-only

    # Non-128-aligned total: single HBM->HBM DMA (no pad + slice round trip).
    return _pallas_copy_dma(flat).reshape(shape)


class Reshape:
    """Drop-in analogue of the PyTorch Reshape(nn.Module)."""

    def __init__(self, *args):
        self.shape = args

    def __call__(self, x, **kwargs):
        return reshape_pallas(x, self.shape, **kwargs)


# --------------------------------------------------------------------------- demo / self-test
if __name__ == "__main__":
    key = jax.random.PRNGKey(0)

    # 1) Reshape(2, -1): NCHW -> (N, C*H*W), 128-aligned -> pipelined 2-D copy kernel.
    x = jax.random.normal(key, (2, 4, 16, 16), dtype=jnp.float32)
    y = jax.block_until_ready(Reshape(2, -1)(x, copy="always"))
    ref = x.reshape(2, -1)
    assert y.shape == ref.shape and y.dtype == ref.dtype
    assert bool(jnp.array_equal(y, ref))

    # 2) Non-128-aligned total (210 elements) -> single HBM->HBM DMA kernel path.
    x2 = jax.random.normal(jax.random.PRNGKey(1), (2, 3, 5, 7), dtype=jnp.float32)
    y2 = jax.block_until_ready(reshape_pallas(x2, (6, -1), copy="always"))
    ref2 = x2.reshape(6, -1)
    assert y2.shape == ref2.shape
    assert bool(jnp.array_equal(y2, ref2))

    # 3) Default "auto" mode: small tensor -> metadata-only bypass (no kernel launch).
    y3 = jax.block_until_ready(reshape_pallas(x, (16, -1)))
    assert bool(jnp.array_equal(y3, x.reshape(16, -1)))

    # 4) Pure-view semantics.
    y4 = jax.block_until_ready(reshape_pallas(x, (2, 4, 256), copy="never"))
    assert bool(jnp.array_equal(y4, x.reshape(2, 4, 256)))

    print("KERNEL_OK")
</pallas_src>

<mosaic_0001>
module attributes {stable_mosaic.version = 11 : i64} {
  func.func @_copy_kernel(%arg0: i32, %arg1: memref<16x128xf32, #tpu.memory_space<vmem>>, %arg2: memref<16x128xf32, #tpu.memory_space<vmem>>) attributes {dimension_semantics = [#tpu.dimension_semantics<parallel>], iteration_bounds = array<i64: 1>, scalar_prefetch = 0 : i64, scratch_operands = 0 : i64, tpu.core_type = #tpu.core_type<tc>, window_params = [{transform_indices = @transform_0, window_bounds = array<i64: 16, 128>}, {transform_indices = @transform_1, window_bounds = array<i64: 16, 128>}]} {
    %c0 = arith.constant 0 : index
    %c0_0 = arith.constant 0 : index
    %0 = vector.load %arg1[%c0, %c0_0] : memref<16x128xf32, #tpu.memory_space<vmem>>, vector<16x128xf32>
    %c0_1 = arith.constant 0 : index
    %c0_2 = arith.constant 0 : index
    %1 = vector.load %arg2[%c0_1, %c0_2] : memref<16x128xf32, #tpu.memory_space<vmem>>, vector<16x128xf32>
    tpu.vector_store %arg2[%c0_1, %c0_2], %0 {strides = array<i32>} : memref<16x128xf32, #tpu.memory_space<vmem>>, vector<16x128xf32>,
    return
  }
  func.func @transform_0(%arg0: i32) -> (i32, i32) {
    %c0_i32 = arith.constant 0 : i32
    %c0_i32_0 = arith.constant 0 : i32
    return %arg0, %c0_i32 : i32, i32
  }
  func.func @transform_1(%arg0: i32) -> (i32, i32) {
    %c0_i32 = arith.constant 0 : i32
    %c0_i32_0 = arith.constant 0 : i32
    return %arg0, %c0_i32 : i32, i32
  }
}

</mosaic_0001>

<llo_original>
// kernel: tpu_custom_call.1
$region0: #{tpu_custom_call.1}
  #allocation0 [shape = 'u32[]', space=smem, size = 0x4, offset = 0x4, fixed_abs, tag = 'smem constant byte address 0x4 - core index']
  #allocation1 [shape = 'u32[144,128]{1,0:T(1,128)}', space=vmem, size = 0x12000, scoped, tag = 'internal scratch']
  %s0 = inlined_call_operand.hbm [shape: f32[16,128], index: 0, kind: input, shape index: {}]
  %s1 = inlined_call_operand.hbm [shape: f32[16,128], index: 1, kind: output, shape index: {}]
  %s2 = sld [smem:[#allocation0]]
  $region18: #{tpu_custom_call.1} parent=0
    _
  %s4 = ssub.s32 1, %s2
  %s5 = scalar_select 0, %s4, %s2
  $region1: #{tpu_custom_call.1} parent=0
    #allocation2 [shape = 'u8[8192]{0}', space=vmem, size = 0x2000, scoped, tag = 'input window, operand 0, single buffered']
    #allocation3 [shape = 's32[1]{0}', space=sflag, size = 0x4, scoped, tag = 'scoped memory for tpu_custom_call.1']
    #allocation4 [shape = 's32[1]{0}', space=sflag, size = 0x4, scoped, tag = 'scoped memory for tpu_custom_call.1']
    #allocation5 [shape = 'u8[8192]{0}', space=vmem, size = 0x2000, scoped, tag = 'output window, operand 0, single buffered']
    %6 = vsyncpa [#allocation3], 0
    %7 = vsyncpa [#allocation4], 0
    // Predicated region
    $region2: #{tpu_custom_call.1} parent=1 // pred_check
      _
    $region3: #{tpu_custom_call.1} parent=1 // pred_check_branch
      %9 = sbr.rel (0) target = $region5
    $region4: #{tpu_custom_call.1} parent=1 // pred_region
      %s11 = ssub.s32 256, 256
      %12 = vsyncadd [#allocation3], %s11
      %s13 = sshll.u32 [#allocation2], 4
      %s14 = int_to_ptr.vmem [resolvable:$true] %s13
      %19 = dma.hbm_to_vmem [thread:$0]  %s0, 256, %s14, [#allocation3], 128, 128, 8
    $region5: #{tpu_custom_call.1} parent=1 // pred_fallthru
      _
    // Predicated region
    $region6: #{tpu_custom_call.1} parent=1 // pred_check
      _
    $region7: #{tpu_custom_call.1} parent=1 // pred_check_branch
      %21 = sbr.rel (0) target = $region9
    $region8: #{tpu_custom_call.1} parent=1 // pred_region
      %22 = dma.done [#allocation3], 256
    $region9: #{tpu_custom_call.1} parent=1 // pred_fallthru
      _
    %v23 = vld [vmem:[#allocation2] sm:$0xff]
    %v24 = vld [vmem:[#allocation2 + $0x8] sm:$0xff]
    %25 = vst [vmem:[#allocation5] sm:$0xff] %v23
    %26 = vst [vmem:[#allocation5 + $0x8] sm:$0xff] %v24
    // Predicated region
    $region10: #{tpu_custom_call.1} parent=1 // pred_check
      _
    $region11: #{tpu_custom_call.1} parent=1 // pred_check_branch
      %28 = sbr.rel (0) target = $region13
    $region12: #{tpu_custom_call.1} parent=1 // pred_region
      %s30 = ssub.s32 256, 256
      %31 = vsyncadd [#allocation4], %s30
      %s32 = sshll.u32 [#allocation5], 4
      %s33 = int_to_ptr.vmem [resolvable:$true] %s32
      %38 = dma.vmem_to_hbm [thread:$0]  %s33, 256, %s1, [#allocation4], 128, 128, 8
    $region13: #{tpu_custom_call.1} parent=1 // pred_fallthru
      _
    // Predicated region
    $region14: #{tpu_custom_call.1} parent=1 // pred_check
      _
    $region15: #{tpu_custom_call.1} parent=1 // pred_check_branch
      %40 = sbr.rel (0) target = $region17
    $region16: #{tpu_custom_call.1} parent=1 // pred_region
      %41 = dma.done [#allocation4], 256
    $region17: #{tpu_custom_call.1} parent=1 // pred_fallthru
      _
    %42 = vsyncpa [#allocation3], 1
    %43 = vsyncpa [#allocation4], 1

</llo_original>
